<compile_context>
chip_gen: v7x
topology: tpu7x:2x2x1
jax: 0.10.0
libtpu: 0.0.40
codegen_flags: <defaults>
</compile_context>

<pallas_src>
import functools

import jax
import jax.numpy as jnp
from jax.experimental import pallas as pl
from jax.experimental.pallas import tpu as pltpu


def _round_up(x: int, m: int) -> int:
    return ((x + m - 1) // m) * m


def _pick_tile(dim: int, align: int, cap: int) -> int:
    """Largest multiple of `align` that divides `dim` and is <= cap.
    `dim` is already a multiple of `align`, so `align` is always valid."""
    cap = max(align, min(cap, dim))
    best = align
    for d in range(align, cap + 1, align):
        if dim % d == 0:
            best = d
    return best


def prepare_linear_params(w, b, *, compute_dtype=jnp.bfloat16):
    """One-time parameter prep (do this at init, NOT per forward call):
       - transpose (N, K) -> (K, N) so the kernel feeds the MXU K-major,
       - pad K and N up to lane (128) multiples,
       - cast the weight to the MXU compute dtype (bias stays f32)."""
    N, K = w.shape
    Kp, Np = _round_up(K, 128), _round_up(N, 128)
    w_kn = w.T  # (K, N)
    if (Kp, Np) != (K, N):
        w_kn = jnp.pad(w_kn, ((0, Kp - K), (0, Np - N)))
    w_kn = w_kn.astype(compute_dtype)

    if b is None:
        b = jnp.zeros((N,), jnp.float32)
    b_row = b.astype(jnp.float32)
    if Np != N:
        b_row = jnp.pad(b_row, (0, Np - N))
    return w_kn, b_row.reshape(1, Np)


def _linear_relu_kernel(x_ref, w_ref, b_ref, o_ref, *, compute_dtype):
    # x_ref : (tm, tk)  activation tile
    # w_ref : (tk, tn)  K-major weight tile (prepared once outside)
    # b_ref : (1,  tn)  bias tile (f32)
    # o_ref : (tm, tn)  f32 output tile, resident across the K grid axis and
    #                   used directly as the accumulator (no scratch).
    k = pl.program_id(2)

    @pl.when(k == 0)
    def _():
        # Fold the bias into the accumulator init (saves an epilogue add).
        o_ref[...] = jnp.zeros_like(o_ref) + b_ref[...]

    o_ref[...] += jnp.dot(
        x_ref[...].astype(compute_dtype),
        w_ref[...],
        preferred_element_type=jnp.float32,
    )

    @pl.when(k == pl.num_programs(2) - 1)
    def _():
        o_ref[...] = jnp.maximum(o_ref[...], 0.0)


def linear_relu(x, w_kn, b_row, out_features, *,
                tm_cap=512, tn_cap=512, tk_cap=1024,
                compute_dtype=jnp.bfloat16):
    """ReLU(x @ W^T + b) with pre-prepared K-major weights (see
    prepare_linear_params).  x: (..., in_features) float32."""
    orig_lead = x.shape[:-1]
    K = x.shape[-1]
    x2 = x.reshape(-1, K)
    M = x2.shape[0]

    Kp, Np = w_kn.shape
    assert Kp == _round_up(K, 128), "weight K padding mismatch"
    assert b_row.shape == (1, Np)
    assert out_features <= Np

    # Pad activations only where actually needed (M to sublane, K to lane).
    Mp = _round_up(M, 8)
    if (Mp, Kp) != (M, K):
        x2 = jnp.pad(x2, ((0, Mp - M), (0, Kp - K)))

    # Aligned tiles that exactly divide the (minimally padded) dims.
    tm = _pick_tile(Mp, 8, tm_cap)
    tn = _pick_tile(Np, 128, tn_cap)
    tk = _pick_tile(Kp, 128, tk_cap)

    # v7x megacore: keep >= 2 blocks along a parallel axis when possible so
    # both TensorCores get work.
    if (Mp // tm) == 1 and (Np // tn) == 1:
        if tm > 8 and Mp >= 16:
            tm = _pick_tile(Mp, 8, tm // 2)
        elif tn > 128 and Np >= 256:
            tn = _pick_tile(Np, 128, tn // 2)

    grid_m, grid_n, grid_k = Mp // tm, Np // tn, Kp // tk

    cost = pl.CostEstimate(
        flops=2 * Mp * Np * Kp,
        transcendentals=0,
        bytes_accessed=(x2.dtype.itemsize * Mp * Kp * grid_n   # x re-read per N tile
                        + w_kn.dtype.itemsize * Kp * Np * grid_m  # w re-read per M tile
                        + 4 * Mp * Np                          # output write
                        + 4 * Np),                             # bias
    )

    kernel = functools.partial(_linear_relu_kernel, compute_dtype=compute_dtype)

    out = pl.pallas_call(
        kernel,
        out_shape=jax.ShapeDtypeStruct((Mp, Np), jnp.float32),
        grid_spec=pltpu.PrefetchScalarGridSpec(
            num_scalar_prefetch=0,
            grid=(grid_m, grid_n, grid_k),
            in_specs=[
                pl.BlockSpec((tm, tk), lambda i, j, k: (i, k)),   # x
                pl.BlockSpec((tk, tn), lambda i, j, k: (k, j)),   # w (K, N)
                pl.BlockSpec((1, tn), lambda i, j, k: (0, j)),    # bias
            ],
            out_specs=pl.BlockSpec((tm, tn), lambda i, j, k: (i, j)),
        ),
        compiler_params=pltpu.CompilerParams(
            dimension_semantics=("parallel", "parallel", "arbitrary"),
        ),
        cost_estimate=cost,
    )(x2, w_kn, b_row)

    out = out[:M, :out_features]
    return out.reshape(orig_lead + (out_features,))


def _reference(x, w, b):
    return jnp.maximum(x @ w.T + b, 0.0)


if __name__ == "__main__":
    key = jax.random.PRNGKey(0)

    # --- Small config consistent with Linear_(in_features, out_features) ---
    batch, in_features, out_features = 8, 32, 64
    kx, kw, kb, key = jax.random.split(key, 4)
    bound = 1.0 / jnp.sqrt(jnp.float32(in_features))
    w = jax.random.uniform(kw, (out_features, in_features), jnp.float32, -bound, bound)
    b = jax.random.uniform(kb, (out_features,), jnp.float32, -bound, bound)
    x = jax.random.normal(kx, (batch, in_features), jnp.float32)
    y_ref = _reference(x, w, b)

    # f32 path (tight tolerance).
    w_kn_f32, b_row = prepare_linear_params(w, b, compute_dtype=jnp.float32)
    y = jax.block_until_ready(
        linear_relu(x, w_kn_f32, b_row, out_features, compute_dtype=jnp.float32))
    assert y.shape == (batch, out_features)
    assert jnp.allclose(y, y_ref, atol=1e-5, rtol=1e-5), "mismatch (small, f32)"

    # bf16 operand path (f32 accumulation) — relaxed tolerance.
    w_kn_bf16, b_row2 = prepare_linear_params(w, b, compute_dtype=jnp.bfloat16)
    y_bf = jax.block_until_ready(
        linear_relu(x, w_kn_bf16, b_row2, out_features, compute_dtype=jnp.bfloat16))
    assert jnp.allclose(y_bf, y_ref, atol=2e-2, rtol=2e-2), "mismatch (small, bf16)"

    # --- Larger, non-tile-multiple config (multi-block grid, ragged K) ---
    M2, K2, N2 = 384, 640, 384
    kx2, kw2, kb2, key = jax.random.split(key, 4)
    bound2 = 1.0 / jnp.sqrt(jnp.float32(K2))
    w2 = jax.random.uniform(kw2, (N2, K2), jnp.float32, -bound2, bound2)
    b2 = jax.random.uniform(kb2, (N2,), jnp.float32, -bound2, bound2)
    x2 = jax.random.normal(kx2, (M2, K2), jnp.float32)
    y2_ref = _reference(x2, w2, b2)

    w2_kn, b2_row = prepare_linear_params(w2, b2, compute_dtype=jnp.float32)
    y2 = jax.block_until_ready(
        linear_relu(x2, w2_kn, b2_row, N2, compute_dtype=jnp.float32))
    assert y2.shape == (M2, N2)
    assert jnp.allclose(y2, y2_ref, atol=1e-4, rtol=1e-4), "mismatch (tiled, f32)"

    w2_kn_bf, b2_row_bf = prepare_linear_params(w2, b2, compute_dtype=jnp.bfloat16)
    y2_bf = jax.block_until_ready(
        linear_relu(x2, w2_kn_bf, b2_row_bf, N2, compute_dtype=jnp.bfloat16))
    assert jnp.allclose(y2_bf, y2_ref, atol=3e-2, rtol=3e-2), "mismatch (tiled, bf16)"

    print("KERNEL_OK")
</pallas_src>

<mosaic_0001>
module attributes {stable_mosaic.version = 11 : i64} {
  func.func @_linear_relu_kernel(%arg0: i32, %arg1: i32, %arg2: i32, %arg3: memref<8x128xf32, #tpu.memory_space<vmem>>, %arg4: memref<128x128xf32, #tpu.memory_space<vmem>>, %arg5: memref<1x128xf32, #tpu.memory_space<vmem>>, %arg6: memref<8x128xf32, #tpu.memory_space<vmem>>) attributes {dimension_semantics = [#tpu.dimension_semantics<parallel>, #tpu.dimension_semantics<parallel>, #tpu.dimension_semantics<arbitrary>], iteration_bounds = array<i64: 1, 1, 1>, scalar_prefetch = 0 : i64, scratch_operands = 0 : i64, tpu.core_type = #tpu.core_type<tc>, window_params = [{transform_indices = @transform_0, window_bounds = array<i64: 8, 128>}, {transform_indices = @transform_1, window_bounds = array<i64: 128, 128>}, {transform_indices = @transform_2, window_bounds = array<i64: 1, 128>}, {transform_indices = @transform_3, window_bounds = array<i64: 8, 128>}]} {
    %c0_i32 = arith.constant 0 : i32
    %0 = arith.cmpi eq, %arg2, %c0_i32 : i32
    %1 = arith.extui %0 : i1 to i32
    %c0_i32_0 = arith.constant 0 : i32
    %2 = arith.cmpi ne, %1, %c0_i32_0 : i32
    scf.if %2 {
      %cst_10 = arith.constant 0.000000e+00 : f32
      %12 = vector.broadcast %cst_10 : f32 to vector<8x128xf32>
      %c0_11 = arith.constant 0 : index
      %c0_12 = arith.constant 0 : index
      %13 = vector.load %arg5[%c0_11, %c0_12] : memref<1x128xf32, #tpu.memory_space<vmem>>, vector<1x128xf32>
      %14 = vector.broadcast %13 : vector<1x128xf32> to vector<8x128xf32>
      %15 = arith.addf %12, %14 : vector<8x128xf32>
      %c0_13 = arith.constant 0 : index
      %c0_14 = arith.constant 0 : index
      %16 = vector.load %arg6[%c0_13, %c0_14] : memref<8x128xf32, #tpu.memory_space<vmem>>, vector<8x128xf32>
      tpu.vector_store %arg6[%c0_13, %c0_14], %15 {strides = array<i32>} : memref<8x128xf32, #tpu.memory_space<vmem>>, vector<8x128xf32>,
    } else {
    }
    %c0 = arith.constant 0 : index
    %c0_1 = arith.constant 0 : index
    %3 = vector.load %arg6[%c0, %c0_1] : memref<8x128xf32, #tpu.memory_space<vmem>>, vector<8x128xf32>
    %c0_2 = arith.constant 0 : index
    %c0_3 = arith.constant 0 : index
    %4 = vector.load %arg3[%c0_2, %c0_3] : memref<8x128xf32, #tpu.memory_space<vmem>>, vector<8x128xf32>
    %c0_4 = arith.constant 0 : index
    %c0_5 = arith.constant 0 : index
    %5 = vector.load %arg4[%c0_4, %c0_5] : memref<128x128xf32, #tpu.memory_space<vmem>>, vector<128x128xf32>
    %cst = arith.constant dense<0.000000e+00> : vector<8x128xf32>
    %6 = tpu.matmul %4, %5, %cst {dimension_numbers = #tpu.dot_dimension_numbers<[1], [0], [0], [1], [0, 0, 1, 1], [], []>} : vector<8x128xf32>, vector<128x128xf32>, vector<8x128xf32> -> vector<8x128xf32>
    %7 = arith.addf %3, %6 : vector<8x128xf32>
    %c0_6 = arith.constant 0 : index
    %c0_7 = arith.constant 0 : index
    %8 = vector.load %arg6[%c0_6, %c0_7] : memref<8x128xf32, #tpu.memory_space<vmem>>, vector<8x128xf32>
    tpu.vector_store %arg6[%c0_6, %c0_7], %7 {strides = array<i32>} : memref<8x128xf32, #tpu.memory_space<vmem>>, vector<8x128xf32>,
    %c0_i32_8 = arith.constant 0 : i32
    %9 = arith.cmpi eq, %arg2, %c0_i32_8 : i32
    %10 = arith.extui %9 : i1 to i32
    %c0_i32_9 = arith.constant 0 : i32
    %11 = arith.cmpi ne, %10, %c0_i32_9 : i32
    scf.if %11 {
      %c0_10 = arith.constant 0 : index
      %c0_11 = arith.constant 0 : index
      %12 = vector.load %arg6[%c0_10, %c0_11] : memref<8x128xf32, #tpu.memory_space<vmem>>, vector<8x128xf32>
      %cst_12 = arith.constant 0.000000e+00 : f32
      %13 = vector.broadcast %cst_12 : f32 to vector<8x128xf32>
      %14 = arith.maximumf %12, %13 : vector<8x128xf32>
      %c0_13 = arith.constant 0 : index
      %c0_14 = arith.constant 0 : index
      %15 = vector.load %arg6[%c0_13, %c0_14] : memref<8x128xf32, #tpu.memory_space<vmem>>, vector<8x128xf32>
      tpu.vector_store %arg6[%c0_13, %c0_14], %14 {strides = array<i32>} : memref<8x128xf32, #tpu.memory_space<vmem>>, vector<8x128xf32>,
    } else {
    }
    return
  }
  func.func @transform_0(%arg0: i32, %arg1: i32, %arg2: i32) -> (i32, i32) {
    %c0_i32 = arith.constant 0 : i32
    return %arg0, %arg2 : i32, i32
  }
  func.func @transform_1(%arg0: i32, %arg1: i32, %arg2: i32) -> (i32, i32) {
    %c0_i32 = arith.constant 0 : i32
    return %arg2, %arg1 : i32, i32
  }
  func.func @transform_2(%arg0: i32, %arg1: i32, %arg2: i32) -> (i32, i32) {
    %c0_i32 = arith.constant 0 : i32
    %c0_i32_0 = arith.constant 0 : i32
    return %c0_i32, %arg1 : i32, i32
  }
  func.func @transform_3(%arg0: i32, %arg1: i32, %arg2: i32) -> (i32, i32) {
    %c0_i32 = arith.constant 0 : i32
    return %arg0, %arg1 : i32, i32
  }
}

</mosaic_0001>

<llo_original>
// kernel: tpu_custom_call.1
$region0: #{tpu_custom_call.1}
  #allocation0 [shape = 'u32[]', space=smem, size = 0x4, offset = 0x4, fixed_abs, tag = 'smem constant byte address 0x4 - core index']
  #allocation1 [shape = 'u32[144,128]{1,0:T(1,128)}', space=vmem, size = 0x12000, scoped, tag = 'internal scratch']
  %s0 = inlined_call_operand.hbm [shape: f32[8,128], index: 0, kind: input, shape index: {}]
  %s1 = inlined_call_operand.hbm [shape: f32[128,128], index: 1, kind: input, shape index: {}]
  %s2 = inlined_call_operand.vmem [shape: f32[1,128], index: 2, kind: input, shape index: {}]
  %s3 = inlined_call_operand.hbm [shape: f32[8,128], index: 3, kind: output, shape index: {}]
  %s4 = sld [smem:[#allocation0]]
  $region38: #{tpu_custom_call.1} parent=0
    _
  %s6 = ssub.s32 1, %s4
  %s7 = scalar_select 0, %s6, %s4
  $region1: #{tpu_custom_call.1} parent=0
    #allocation2 [shape = 'u8[4096]{0}', space=vmem, size = 0x1000, scoped, tag = 'input window, operand 0, single buffered']
    #allocation3 [shape = 's32[1]{0}', space=sflag, size = 0x4, scoped, tag = 'scoped memory for tpu_custom_call.1']
    #allocation4 [shape = 's32[1]{0}', space=sflag, size = 0x4, scoped, tag = 'scoped memory for tpu_custom_call.1']
    #allocation5 [shape = 'u8[65536]{0}', space=vmem, size = 0x10000, scoped, tag = 'input window, operand 1, single buffered']
    #allocation6 [shape = 's32[1]{0}', space=sflag, size = 0x4, scoped, tag = 'scoped memory for tpu_custom_call.1']
    #allocation7 [shape = 'u8[4096]{0}', space=vmem, size = 0x1000, scoped, tag = 'output window, operand 0, single buffered']
    %8 = vsyncpa [#allocation3], 0
    %9 = vsyncpa [#allocation6], 0
    %10 = vsyncpa [#allocation4], 0
    // Predicated region
    $region2: #{tpu_custom_call.1} parent=1 // pred_check
      _
    $region3: #{tpu_custom_call.1} parent=1 // pred_check_branch
      %12 = sbr.rel (0) target = $region5
    $region4: #{tpu_custom_call.1} parent=1 // pred_region
      %s14 = ssub.s32 128, 128
      %15 = vsyncadd [#allocation3], %s14
      %s17 = sshll.u32 [#allocation2], 4
      %s18 = int_to_ptr.vmem [resolvable:$true] %s17
      %20 = dma.hbm_to_vmem [thread:$0]  %s0, 128, %s18, [#allocation3]
    $region5: #{tpu_custom_call.1} parent=1 // pred_fallthru
      _
    // Predicated region
    $region6: #{tpu_custom_call.1} parent=1 // pred_check
      _
    $region7: #{tpu_custom_call.1} parent=1 // pred_check_branch
      %22 = sbr.rel (0) target = $region9
    $region8: #{tpu_custom_call.1} parent=1 // pred_region
      %s24 = ssub.s32 2048, 2048
      %25 = vsyncadd [#allocation6], %s24
      %s26 = sshll.u32 [#allocation5], 4
      %s27 = int_to_ptr.vmem [resolvable:$true] %s26
      %32 = dma.hbm_to_vmem [thread:$0]  %s1, 2048, %s27, [#allocation6], 128, 128, 8
    $region9: #{tpu_custom_call.1} parent=1 // pred_fallthru
      _
    // Predicated region
    $region10: #{tpu_custom_call.1} parent=1 // pred_check
      _
    $region11: #{tpu_custom_call.1} parent=1 // pred_check_branch
      %34 = sbr.rel (0) target = $region13
    $region12: #{tpu_custom_call.1} parent=1 // pred_region
      _
    $region13: #{tpu_custom_call.1} parent=1 // pred_fallthru
      _
    // Predicated region
    $region14: #{tpu_custom_call.1} parent=1 // pred_check
      _
    $region15: #{tpu_custom_call.1} parent=1 // pred_check_branch
      %36 = sbr.rel (0) target = $region17
    $region16: #{tpu_custom_call.1} parent=1 // pred_region
      %37 = dma.done [#allocation3], 128
    $region17: #{tpu_custom_call.1} parent=1 // pred_fallthru
      _
    // Predicated region
    $region18: #{tpu_custom_call.1} parent=1 // pred_check
      _
    $region19: #{tpu_custom_call.1} parent=1 // pred_check_branch
      %39 = sbr.rel (0) target = $region21
    $region20: #{tpu_custom_call.1} parent=1 // pred_region
      %40 = dma.done [#allocation6], 2048
    $region21: #{tpu_custom_call.1} parent=1 // pred_fallthru
      _
    %p41 = scmp.eq.s32.totalorder 0, 0
    // Predicated region
    $region22: #{tpu_custom_call.1} parent=1 // pred_check
      %p42 = pneg %p41
    $region23: #{tpu_custom_call.1} parent=1 // pred_check_branch
      %44 = sbr.rel (%p42) target = $region25
    $region24: #{tpu_custom_call.1} parent=1 // pred_region
      %v45 = vld [vmem:[%s2] sm:$0x1]
      %v47 = vlaneseq
      %v48 = vshrl.u32 %v47, 7
      %v49 = vsub.s32 0, %v48
      %v50 = vrot.slane %v45, %v49
      %v52 = vadd.f32 %v50, 0.0
      %53 = vst [vmem:[#allocation7] sm:$0xff] %v52
    $region25: #{tpu_custom_call.1} parent=1 // pred_fallthru
      _
    %v54 = vld [vmem:[#allocation7] sm:$0xff]
    %v55 = vld [vmem:[#allocation2] sm:$0xff]
    %v56 = vld [vmem:[#allocation5] sm:$0xff]
    %v57 = vld [vmem:[#allocation5 + $0x8] sm:$0xff]
    %v58 = vld [vmem:[#allocation5 + $0x10] sm:$0xff]
    %v59 = vld [vmem:[#allocation5 + $0x18] sm:$0xff]
    %v60 = vld [vmem:[#allocation5 + $0x20] sm:$0xff]
    %v61 = vld [vmem:[#allocation5 + $0x28] sm:$0xff]
    %v62 = vld [vmem:[#allocation5 + $0x30] sm:$0xff]
    %v63 = vld [vmem:[#allocation5 + $0x38] sm:$0xff]
    %v64 = vld [vmem:[#allocation5 + $0x40] sm:$0xff]
    %v65 = vld [vmem:[#allocation5 + $0x48] sm:$0xff]
    %v66 = vld [vmem:[#allocation5 + $0x50] sm:$0xff]
    %v67 = vld [vmem:[#allocation5 + $0x58] sm:$0xff]
    %v68 = vld [vmem:[#allocation5 + $0x60] sm:$0xff]
    %v69 = vld [vmem:[#allocation5 + $0x68] sm:$0xff]
    %v70 = vld [vmem:[#allocation5 + $0x70] sm:$0xff]
    %v71 = vld [vmem:[#allocation5 + $0x78] sm:$0xff]
    %72 = vmatprep.subr.mxu0 0.0
    %73 = vmatpush1.msra.mxu0 %v56
    %74 = vmatprep.subr.mxu0 0.0
    %75 = vmatpush1.msra.mxu0 %v57
    %76 = vmatprep.subr.mxu0 0.0
    %77 = vmatpush1.msra.mxu0 %v58
    %78 = vmatprep.subr.mxu0 0.0
    %79 = vmatpush1.msra.mxu0 %v59
    %80 = vmatprep.subr.mxu0 0.0
    %81 = vmatpush1.msra.mxu0 %v60
    %82 = vmatprep.subr.mxu0 0.0
    %83 = vmatpush1.msra.mxu0 %v61
    %84 = vmatprep.subr.mxu0 0.0
    %85 = vmatpush1.msra.mxu0 %v62
    %86 = vmatprep.subr.mxu0 0.0
    %87 = vmatpush1.msra.mxu0 %v63
    %88 = vmatprep.subr.mxu0 0.0
    %89 = vmatpush1.msra.mxu0 %v64
    %90 = vmatprep.subr.mxu0 0.0
    %91 = vmatpush1.msra.mxu0 %v65
    %92 = vmatprep.subr.mxu0 0.0
    %93 = vmatpush1.msra.mxu0 %v66
    %94 = vmatprep.subr.mxu0 0.0
    %95 = vmatpush1.msra.mxu0 %v67
    %96 = vmatprep.subr.mxu0 0.0
    %97 = vmatpush1.msra.mxu0 %v68
    %98 = vmatprep.subr.mxu0 0.0
    %99 = vmatpush1.msra.mxu0 %v69
    %100 = vmatprep.subr.mxu0 0.0
    %101 = vmatpush1.msra.mxu0 %v70
    %102 = vmatprep.subr.mxu0 0.0
    %103 = vmatpush1.msra.mxu0 %v71
    %104 = vmatprep.subr.mxu0 0.0
    %105 = vmatpush1.msra.mxu0 0.0
    %106 = vmatprep.subr.mxu0 0.0
    %107 = vmatpush1.msra.mxu0 0.0
    %108 = vmatprep.subr.mxu0 0.0
    %109 = vmatpush1.msra.mxu0 0.0
    %110 = vmatprep.subr.mxu0 0.0
    %111 = vmatpush1.msra.mxu0 0.0
    %112 = vmatprep.subr.mxu0 0.0
    %113 = vmatpush1.msra.mxu0 0.0
    %114 = vmatprep.subr.mxu0 0.0
    %115 = vmatpush1.msra.mxu0 0.0
    %116 = vmatprep.subr.mxu0 0.0
    %117 = vmatpush1.msra.mxu0 0.0
    %118 = vmatprep.subr.mxu0 0.0
    %119 = vmatpush1.msra.mxu0 0.0
    %120 = vmatprep.subr.mxu0 0.0
    %121 = vmatpush1.msra.mxu0 0.0
    %122 = vmatprep.subr.mxu0 0.0
    %123 = vmatpush1.msra.mxu0 0.0
    %124 = vmatprep.subr.mxu0 0.0
    %125 = vmatpush1.msra.mxu0 0.0
    %126 = vmatprep.subr.mxu0 0.0
    %127 = vmatpush1.msra.mxu0 0.0
    %128 = vmatprep.subr.mxu0 0.0
    %129 = vmatpush1.msra.mxu0 0.0
    %130 = vmatprep.subr.mxu0 0.0
    %131 = vmatpush1.msra.mxu0 0.0
    %132 = vmatprep.subr.mxu0 0.0
    %133 = vmatpush1.msra.mxu0 0.0
    %134 = vmatprep.subr.mxu0 0.0
    %135 = vmatpush1.msra.mxu0 0.0
    %136 = vmatprep.mubr.f32.mxu0 0.0
    %137 = vmatmul.mubr.f32.gmra.mrb[0].mxu0 %v55
    %v138 = vpop.f32.mrb[0].mxu0
    %v139 = vadd.f32 0.0, %v138
    %v140 = vpop.f32.mrb[0].mxu0
    %141 = vdwg.mxu0
    %v142 = vadd.f32 %v54, %v139
    %143 = vst [vmem:[#allocation7] sm:$0xff] %v142
    // Predicated region
    $region26: #{tpu_custom_call.1} parent=1 // pred_check
      %p144 = pneg %p41
    $region27: #{tpu_custom_call.1} parent=1 // pred_check_branch
      %146 = sbr.rel (%p144) target = $region29
    $region28: #{tpu_custom_call.1} parent=1 // pred_region
      %v147 = vld [vmem:[#allocation7] sm:$0xff]
      %v148 = vmax.f32 %v147, 0.0
      %149 = vst [vmem:[#allocation7] sm:$0xff] %v148
    $region29: #{tpu_custom_call.1} parent=1 // pred_fallthru
      _
    // Predicated region
    $region30: #{tpu_custom_call.1} parent=1 // pred_check
      _
    $region31: #{tpu_custom_call.1} parent=1 // pred_check_branch
      %151 = sbr.rel (0) target = $region33
    $region32: #{tpu_custom_call.1} parent=1 // pred_region
      %s153 = ssub.s32 128, 128
      %154 = vsyncadd [#allocation4], %s153
      %s156 = sshll.u32 [#allocation7], 4
      %s157 = int_to_ptr.vmem [resolvable:$true] %s156
      %159 = dma.vmem_to_hbm [thread:$0]  %s157, 128, %s3, [#allocation4]
    $region33: #{tpu_custom_call.1} parent=1 // pred_fallthru
      _
    // Predicated region
    $region34: #{tpu_custom_call.1} parent=1 // pred_check
      _
    $region35: #{tpu_custom_call.1} parent=1 // pred_check_branch
      %161 = sbr.rel (0) target = $region37
    $region36: #{tpu_custom_call.1} parent=1 // pred_region
      %162 = dma.done [#allocation4], 128
    $region37: #{tpu_custom_call.1} parent=1 // pred_fallthru
      _
    %163 = vsyncpa [#allocation3], 1
    %164 = vsyncpa [#allocation6], 1
    %165 = vsyncpa [#allocation4], 1

</llo_original>
